<compile_context>
chip_gen: v7x
topology: tpu7x:2x2x1
jax: 0.10.0
libtpu: 0.0.40
codegen_flags: <defaults>
</compile_context>

<pallas_src>
import jax
import jax.numpy as jnp
from jax.experimental import pallas as pl
from jax.experimental.pallas import tpu as pltpu


def _round_up(x, m):
    return (x + m - 1) // m * m


def _tensorcores_per_chip():
    """Best-effort TensorCores-per-chip count (v7x=2, v5e/v6e=1).

    Defaults to 1 when unknown, which is the safe choice: we simply skip the
    megacore tile split rather than adding a useless grid step on single-TC chips.
    """
    try:
        dev = jax.devices()[0]
        for attr in ("num_cores", "core_count", "num_tensorcores"):
            v = getattr(dev, attr, None)
            if isinstance(v, int) and 0 < v <= 8:
                return v
    except Exception:
        pass
    try:
        info = pltpu.get_tpu_info()
        for attr in ("tensorcores_per_chip", "num_tensorcores", "cores_per_chip", "num_cores"):
            v = getattr(info, attr, None)
            if isinstance(v, int) and 0 < v <= 8:
                return v
    except Exception:
        pass
    return 1


def _make_mlp_kernel(n_layers, act_dtype):
    """Kernel closure over the (static) number of linear layers.

    Refs (in order):
      x_ref : (in_dim, tile_m)   activations, batch on the lane axis
      w0, b0, w1, b1, ...        W_l: (out_l, in_l) (PyTorch layout), b_l: (out_l, 1) f32
      o_ref : (out_dim, tile_m)
    """

    def kernel(*refs):
        x_ref = refs[0]
        o_ref = refs[-1]
        param_refs = refs[1:-1]

        h = x_ref[...]                              # (in_dim, tile_m)
        for li in range(n_layers):
            w = param_refs[2 * li][...]             # (out, in)
            b = param_refs[2 * li + 1][...]         # (out, 1), f32
            # MXU matmul with f32 accumulation; f32 bias broadcasts along lanes.
            acc = jnp.dot(w, h.astype(w.dtype),
                          preferred_element_type=jnp.float32) + b
            if li < n_layers - 1:
                # Downcast AFTER the f32 accumulation/bias; tanh + the loop-carried
                # activation then run in act_dtype (bf16 on the fast path), halving
                # the inter-layer vreg/VMEM footprint and using the bf16 EUP on v6e/v7x.
                h = jnp.tanh(acc.astype(act_dtype))
            else:
                h = acc                             # no activation after the last layer
        o_ref[...] = h.astype(o_ref.dtype)

    return kernel


def structnet_forward(x, params, *, tile_m=16384, operand_dtype=jnp.float32,
                      first_layer_f32=True, input_transposed=False,
                      output_transposed=False):
    """StructNet forward pass with a fused Pallas TPU kernel.

    x:      (N, layers[0]) f32, or (layers[0], N) if input_transposed=True.
    params: list of (W, b) in PyTorch nn.Linear layout: W (out, in), b (out,).
    Returns (N, layers[-1]) f32, or (layers[-1], N) if output_transposed=True.

    operand_dtype=bf16 feeds the MXU bf16 weights/activations (valid on v5e/v6e/v7x;
    v5e's MXU is bf16-native) while keeping f32 accumulation and f32 bias adds.
    The first layer (raw PINN coordinates) stays f32 unless first_layer_f32=False.
    A surrounding program should pass/accept transposed (features, batch) arrays
    to skip both host-side XLA transposes (pure layout plumbing otherwise).
    """
    n_layers = len(params)
    in_dim = int(params[0][0].shape[1])
    out_dim = int(params[-1][0].shape[0])

    x_in_dtype = jnp.float32 if first_layer_f32 else operand_dtype
    if input_transposed:
        assert x.shape[0] == in_dim
        n = int(x.shape[1])
        x_t = x.astype(x_in_dtype)
    else:
        assert x.shape[1] == in_dim
        n = int(x.shape[0])
        x_t = x.T.astype(x_in_dtype)   # layout plumbing only (see docstring)

    # ---- tile size selection -------------------------------------------------
    op_bytes = jnp.dtype(operand_dtype).itemsize
    widths = [in_dim] + [int(w.shape[0]) for (w, _) in params]
    # Per-batch-row VMEM bytes: double-buffered input/output blocks plus a
    # conservative f32 bound for live/spilled intermediate activations.
    bytes_per_row = (2 * in_dim * jnp.dtype(x_in_dtype).itemsize
                     + 2 * out_dim * 4
                     + 4 * sum(widths))
    weight_bytes = sum(int(w.size) * op_bytes + int(b.size) * 4 for (w, b) in params)

    vmem_budget = 20 * 1024 * 1024        # headroom inside v7x's 32 MiB scoped / 64 MiB physical
    cap = max(128, (vmem_budget // bytes_per_row) // 128 * 128)

    tile_m = max(128, min(int(tile_m), cap, _round_up(n, 128)))
    # Only split a single full tile into >=2 grid steps on multi-TensorCore chips
    # (v7x megacore sharding of the "parallel" axis); on single-TC v5e/v6e the
    # extra grid step is pure overhead.
    if _tensorcores_per_chip() >= 2 and n > 128 and pl.cdiv(n, tile_m) < 2:
        tile_m = max(128, _round_up(pl.cdiv(n, 2), 128))
    grid = (pl.cdiv(n, tile_m),)

    # ---- specs / params ------------------------------------------------------
    in_specs = [pl.BlockSpec((in_dim, tile_m), lambda i: (0, i))]
    flat_params = []
    for li, (w, b) in enumerate(params):
        w_dtype = jnp.float32 if (li == 0 and first_layer_f32) else operand_dtype
        # Grid-invariant operands: whole arrays resident in VMEM, no pipelining.
        in_specs.append(pl.BlockSpec(memory_space=pltpu.MemorySpace.VMEM))
        in_specs.append(pl.BlockSpec(memory_space=pltpu.MemorySpace.VMEM))
        flat_params.append(w.astype(w_dtype))
        flat_params.append(b.reshape(-1, 1).astype(jnp.float32))  # 2-D f32 bias
    out_spec = pl.BlockSpec((out_dim, tile_m), lambda i: (0, i))

    cost = pl.CostEstimate(
        flops=2 * n * sum(int(w.shape[0]) * int(w.shape[1]) for (w, _) in params),
        transcendentals=n * sum(int(w.shape[0]) for (w, _) in params[:-1]),
        bytes_accessed=(n * in_dim * jnp.dtype(x_in_dtype).itemsize
                        + n * out_dim * 4 + weight_bytes),
    )

    vmem_limit = int(min(48 * 1024 * 1024,
                         max(32 * 1024 * 1024,
                             2 * (bytes_per_row * tile_m + weight_bytes))))

    out_t = pl.pallas_call(
        _make_mlp_kernel(n_layers, operand_dtype),
        out_shape=jax.ShapeDtypeStruct((out_dim, n), jnp.float32),
        grid_spec=pltpu.PrefetchScalarGridSpec(
            num_scalar_prefetch=0,
            grid=grid,
            in_specs=in_specs,
            out_specs=out_spec,
        ),
        compiler_params=pltpu.CompilerParams(
            dimension_semantics=("parallel",),
            vmem_limit_bytes=vmem_limit,
        ),
        cost_estimate=cost,
    )(x_t, *flat_params)

    return out_t if output_transposed else out_t.T


def init_structnet_params(key, layers):
    """Deterministic init mimicking nn.Linear's U(-1/sqrt(fan_in), 1/sqrt(fan_in)).

    Returns PyTorch-layout params: W (out, in), b (out,).
    """
    params = []
    for i in range(len(layers) - 1):
        fan_in, fan_out = layers[i], layers[i + 1]
        key, kw, kb = jax.random.split(key, 3)
        bound = 1.0 / (float(fan_in) ** 0.5)
        w = jax.random.uniform(kw, (fan_out, fan_in), jnp.float32, -bound, bound)
        b = jax.random.uniform(kb, (fan_out,), jnp.float32, -bound, bound)
        params.append((w, b))
    return params


def structnet_reference(x, params):
    """Plain-JAX reference of the PyTorch forward (W in (out, in) layout)."""
    h = x
    for li, (w, b) in enumerate(params):
        h = h @ w.T + b
        if li < len(params) - 1:
            h = jnp.tanh(h)
    return h


if __name__ == "__main__":
    # StructNet maps (x, y, z, t) -> (u_x, u_y, u_z): layers = [4, hidden, hidden, 3]
    layers = [4, 32, 32, 3]
    batch = 1000  # deliberately NOT a multiple of 128/tile_m: exercises partial tiles

    key = jax.random.PRNGKey(0)
    key, kx = jax.random.split(key)
    x = jax.random.normal(kx, (batch, layers[0]), jnp.float32)
    params = init_structnet_params(key, layers)
    ref = structnet_reference(x, params)

    # 1) f32, default (large) tile -> single padded block; bit-tight check.
    out = jax.block_until_ready(structnet_forward(x, params))
    assert out.shape == (batch, layers[-1])
    assert jnp.allclose(out, ref, atol=1e-5, rtol=1e-5), "f32 (single padded tile) mismatch"

    # 2) f32, small explicit tile -> 4 grid steps with a partial last tile.
    out_small = jax.block_until_ready(structnet_forward(x, params, tile_m=256))
    assert jnp.allclose(out_small, ref, atol=1e-5, rtol=1e-5), "f32 (partial last tile) mismatch"

    # 3) bf16 MXU/activation fast path (f32 first layer + f32 accumulation).
    out_bf16 = jax.block_until_ready(
        structnet_forward(x, params, operand_dtype=jnp.bfloat16))
    assert out_bf16.shape == (batch, layers[-1])
    assert jnp.allclose(out_bf16, ref, atol=5e-2, rtol=5e-2), "bf16 output mismatch"

    # 4) Fully transposed I/O path (no host-side transposes at all).
    out_tt = jax.block_until_ready(
        structnet_forward(x.T, params, input_transposed=True, output_transposed=True))
    assert out_tt.shape == (layers[-1], batch)
    assert jnp.allclose(out_tt, ref.T, atol=1e-5, rtol=1e-5), "transposed-I/O mismatch"

    print("KERNEL_OK")
</pallas_src>

<mosaic_0001>
module attributes {stable_mosaic.version = 11 : i64} {
  func.func @kernel(%arg0: i32, %arg1: memref<4x1024xf32, #tpu.memory_space<vmem>>, %arg2: memref<32x4xf32, #tpu.memory_space<vmem>>, %arg3: memref<32x1xf32, #tpu.memory_space<vmem>>, %arg4: memref<32x32xf32, #tpu.memory_space<vmem>>, %arg5: memref<32x1xf32, #tpu.memory_space<vmem>>, %arg6: memref<3x32xf32, #tpu.memory_space<vmem>>, %arg7: memref<3x1xf32, #tpu.memory_space<vmem>>, %arg8: memref<3x1024xf32, #tpu.memory_space<vmem>>) attributes {dimension_semantics = [#tpu.dimension_semantics<parallel>], iteration_bounds = array<i64: 1>, scalar_prefetch = 0 : i64, scratch_operands = 0 : i64, tpu.core_type = #tpu.core_type<tc>, window_params = [{transform_indices = @transform_0, window_bounds = array<i64: 4, 1024>}, {pipeline_mode = #tpu.pipeline_mode<synchronous>, transform_indices = @transform_1, window_bounds = array<i64: 32, 4>}, {pipeline_mode = #tpu.pipeline_mode<synchronous>, transform_indices = @transform_2, window_bounds = array<i64: 32, 1>}, {pipeline_mode = #tpu.pipeline_mode<synchronous>, transform_indices = @transform_3, window_bounds = array<i64: 32, 32>}, {pipeline_mode = #tpu.pipeline_mode<synchronous>, transform_indices = @transform_4, window_bounds = array<i64: 32, 1>}, {pipeline_mode = #tpu.pipeline_mode<synchronous>, transform_indices = @transform_5, window_bounds = array<i64: 3, 32>}, {pipeline_mode = #tpu.pipeline_mode<synchronous>, transform_indices = @transform_6, window_bounds = array<i64: 3, 1>}, {transform_indices = @transform_7, window_bounds = array<i64: 3, 1024>}]} {
    %c0 = arith.constant 0 : index
    %c0_0 = arith.constant 0 : index
    %0 = vector.load %arg1[%c0, %c0_0] : memref<4x1024xf32, #tpu.memory_space<vmem>>, vector<4x1024xf32>
    %c0_1 = arith.constant 0 : index
    %c0_2 = arith.constant 0 : index
    %1 = vector.load %arg2[%c0_1, %c0_2] : memref<32x4xf32, #tpu.memory_space<vmem>>, vector<32x4xf32>
    %c0_3 = arith.constant 0 : index
    %c0_4 = arith.constant 0 : index
    %2 = vector.load %arg3[%c0_3, %c0_4] : memref<32x1xf32, #tpu.memory_space<vmem>>, vector<32x1xf32>
    %cst = arith.constant dense<0.000000e+00> : vector<32x1024xf32>
    %3 = tpu.matmul %1, %0, %cst {dimension_numbers = #tpu.dot_dimension_numbers<[1], [0], [0], [1], [0, 0, 1, 1], [], []>} : vector<32x4xf32>, vector<4x1024xf32>, vector<32x1024xf32> -> vector<32x1024xf32>
    %4 = vector.broadcast %2 : vector<32x1xf32> to vector<32x1024xf32>
    %5 = arith.addf %3, %4 : vector<32x1024xf32>
    %6 = math.tanh %5 : vector<32x1024xf32>
    %c0_5 = arith.constant 0 : index
    %c0_6 = arith.constant 0 : index
    %7 = vector.load %arg4[%c0_5, %c0_6] : memref<32x32xf32, #tpu.memory_space<vmem>>, vector<32x32xf32>
    %c0_7 = arith.constant 0 : index
    %c0_8 = arith.constant 0 : index
    %8 = vector.load %arg5[%c0_7, %c0_8] : memref<32x1xf32, #tpu.memory_space<vmem>>, vector<32x1xf32>
    %cst_9 = arith.constant dense<0.000000e+00> : vector<32x1024xf32>
    %9 = tpu.matmul %7, %6, %cst_9 {dimension_numbers = #tpu.dot_dimension_numbers<[1], [0], [0], [1], [0, 0, 1, 1], [], []>} : vector<32x32xf32>, vector<32x1024xf32>, vector<32x1024xf32> -> vector<32x1024xf32>
    %10 = vector.broadcast %8 : vector<32x1xf32> to vector<32x1024xf32>
    %11 = arith.addf %9, %10 : vector<32x1024xf32>
    %12 = math.tanh %11 : vector<32x1024xf32>
    %c0_10 = arith.constant 0 : index
    %c0_11 = arith.constant 0 : index
    %13 = vector.load %arg6[%c0_10, %c0_11] : memref<3x32xf32, #tpu.memory_space<vmem>>, vector<3x32xf32>
    %c0_12 = arith.constant 0 : index
    %c0_13 = arith.constant 0 : index
    %14 = vector.load %arg7[%c0_12, %c0_13] : memref<3x1xf32, #tpu.memory_space<vmem>>, vector<3x1xf32>
    %cst_14 = arith.constant dense<0.000000e+00> : vector<3x1024xf32>
    %15 = tpu.matmul %13, %12, %cst_14 {dimension_numbers = #tpu.dot_dimension_numbers<[1], [0], [0], [1], [0, 0, 1, 1], [], []>} : vector<3x32xf32>, vector<32x1024xf32>, vector<3x1024xf32> -> vector<3x1024xf32>
    %16 = vector.broadcast %14 : vector<3x1xf32> to vector<3x1024xf32>
    %17 = arith.addf %15, %16 : vector<3x1024xf32>
    %c0_15 = arith.constant 0 : index
    %c0_16 = arith.constant 0 : index
    %18 = vector.load %arg8[%c0_15, %c0_16] : memref<3x1024xf32, #tpu.memory_space<vmem>>, vector<3x1024xf32>
    tpu.vector_store %arg8[%c0_15, %c0_16], %17 {strides = array<i32>} : memref<3x1024xf32, #tpu.memory_space<vmem>>, vector<3x1024xf32>,
    return
  }
  func.func @transform_0(%arg0: i32) -> (i32, i32) {
    %c0_i32 = arith.constant 0 : i32
    %c0_i32_0 = arith.constant 0 : i32
    return %c0_i32, %arg0 : i32, i32
  }
  func.func @transform_1(%arg0: i32) -> (i32, i32) {
    %c0_i32 = arith.constant 0 : i32
    %c0_i32_0 = arith.constant 0 : i32
    %c0_i32_1 = arith.constant 0 : i32
    return %c0_i32, %c0_i32_0 : i32, i32
  }
  func.func @transform_2(%arg0: i32) -> (i32, i32) {
    %c0_i32 = arith.constant 0 : i32
    %c0_i32_0 = arith.constant 0 : i32
    %c0_i32_1 = arith.constant 0 : i32
    return %c0_i32, %c0_i32_0 : i32, i32
  }
  func.func @transform_3(%arg0: i32) -> (i32, i32) {
    %c0_i32 = arith.constant 0 : i32
    %c0_i32_0 = arith.constant 0 : i32
    %c0_i32_1 = arith.constant 0 : i32
    return %c0_i32, %c0_i32_0 : i32, i32
  }
  func.func @transform_4(%arg0: i32) -> (i32, i32) {
    %c0_i32 = arith.constant 0 : i32
    %c0_i32_0 = arith.constant 0 : i32
    %c0_i32_1 = arith.constant 0 : i32
    return %c0_i32, %c0_i32_0 : i32, i32
  }
  func.func @transform_5(%arg0: i32) -> (i32, i32) {
    %c0_i32 = arith.constant 0 : i32
    %c0_i32_0 = arith.constant 0 : i32
    %c0_i32_1 = arith.constant 0 : i32
    return %c0_i32, %c0_i32_0 : i32, i32
  }
  func.func @transform_6(%arg0: i32) -> (i32, i32) {
    %c0_i32 = arith.constant 0 : i32
    %c0_i32_0 = arith.constant 0 : i32
    %c0_i32_1 = arith.constant 0 : i32
    return %c0_i32, %c0_i32_0 : i32, i32
  }
  func.func @transform_7(%arg0: i32) -> (i32, i32) {
    %c0_i32 = arith.constant 0 : i32
    %c0_i32_0 = arith.constant 0 : i32
    return %c0_i32, %arg0 : i32, i32
  }
}

</mosaic_0001>

<llo_original>
// kernel: tpu_custom_call.1
$region0: #{tpu_custom_call.1}
  #allocation0 [shape = 'u32[]', space=smem, size = 0x4, offset = 0x4, fixed_abs, tag = 'smem constant byte address 0x4 - core index']
  #allocation1 [shape = 'u32[144,128]{1,0:T(1,128)}', space=vmem, size = 0x12000, scoped, tag = 'internal scratch']
  %s0 = inlined_call_operand.vmem [shape: f32[4,1000], index: 0, kind: input, shape index: {}]
  %s1 = inlined_call_operand.vmem [shape: f32[32,4], index: 1, kind: input, shape index: {}]
  %s2 = inlined_call_operand.vmem [shape: f32[32,1], index: 2, kind: input, shape index: {}]
  %s3 = inlined_call_operand.vmem [shape: f32[32,32], index: 3, kind: input, shape index: {}]
  %s4 = inlined_call_operand.vmem [shape: f32[32,1], index: 4, kind: input, shape index: {}]
  %s5 = inlined_call_operand.vmem [shape: f32[3,32], index: 5, kind: input, shape index: {}]
  %s6 = inlined_call_operand.vmem [shape: f32[3,1], index: 6, kind: input, shape index: {}]
  %s7 = inlined_call_operand.hbm [shape: f32[3,1000], index: 7, kind: output, shape index: {}]
  %s8 = sld [smem:[#allocation0]]
  $region38: #{tpu_custom_call.1} parent=0
    _
  %s10 = ssub.s32 1, %s8
  %s11 = scalar_select 0, %s10, %s8
  $region1: #{tpu_custom_call.1} parent=0
    #allocation2 [shape = 'u8[16384]{0}', space=vmem, size = 0x4000, scoped, tag = 'output window, operand 0, single buffered']
    #allocation3 [shape = 's32[1]{0}', space=sflag, size = 0x4, scoped, tag = 'scoped memory for tpu_custom_call.1']
    %12 = vsyncpa [#allocation3], 0
    // Predicated region
    $region2: #{tpu_custom_call.1} parent=1 // pred_check
      _
    $region3: #{tpu_custom_call.1} parent=1 // pred_check_branch
      %14 = sbr.rel (0) target = $region5
    $region4: #{tpu_custom_call.1} parent=1 // pred_region
      _
    $region5: #{tpu_custom_call.1} parent=1 // pred_fallthru
      _
    // Predicated region
    $region6: #{tpu_custom_call.1} parent=1 // pred_check
      _
    $region7: #{tpu_custom_call.1} parent=1 // pred_check_branch
      %16 = sbr.rel (0) target = $region9
    $region8: #{tpu_custom_call.1} parent=1 // pred_region
      _
    $region9: #{tpu_custom_call.1} parent=1 // pred_fallthru
      _
    // Predicated region
    $region10: #{tpu_custom_call.1} parent=1 // pred_check
      _
    $region11: #{tpu_custom_call.1} parent=1 // pred_check_branch
      %18 = sbr.rel (0) target = $region13
    $region12: #{tpu_custom_call.1} parent=1 // pred_region
      _
    $region13: #{tpu_custom_call.1} parent=1 // pred_fallthru
      _
    // Predicated region
    $region14: #{tpu_custom_call.1} parent=1 // pred_check
      _
    $region15: #{tpu_custom_call.1} parent=1 // pred_check_branch
      %20 = sbr.rel (0) target = $region17
    $region16: #{tpu_custom_call.1} parent=1 // pred_region
      _
    $region17: #{tpu_custom_call.1} parent=1 // pred_fallthru
      _
    // Predicated region
    $region18: #{tpu_custom_call.1} parent=1 // pred_check
      _
    $region19: #{tpu_custom_call.1} parent=1 // pred_check_branch
      %22 = sbr.rel (0) target = $region21
    $region20: #{tpu_custom_call.1} parent=1 // pred_region
      _
    $region21: #{tpu_custom_call.1} parent=1 // pred_fallthru
      _
    // Predicated region
    $region22: #{tpu_custom_call.1} parent=1 // pred_check
      _
    $region23: #{tpu_custom_call.1} parent=1 // pred_check_branch
      %24 = sbr.rel (0) target = $region25
    $region24: #{tpu_custom_call.1} parent=1 // pred_region
      _
    $region25: #{tpu_custom_call.1} parent=1 // pred_fallthru
      _
    // Predicated region
    $region26: #{tpu_custom_call.1} parent=1 // pred_check
      _
    $region27: #{tpu_custom_call.1} parent=1 // pred_check_branch
      %26 = sbr.rel (0) target = $region29
    $region28: #{tpu_custom_call.1} parent=1 // pred_region
      _
    $region29: #{tpu_custom_call.1} parent=1 // pred_fallthru
      _
    %v27 = vld [vmem:[%s0] sm:$0xff]
    %v28 = vld [vmem:[%s0 + $0x8] sm:$0xff]
    %v29 = vld [vmem:[%s0 + $0x10] sm:$0xff]
    %v30 = vld [vmem:[%s0 + $0x18] sm:$0xff]
    %v31 = vld [vmem:[%s1] sm:$0xff]
    %v32 = vld [vmem:[%s1 + $0x8] sm:$0xff]
    %v33 = vld [vmem:[%s1 + $0x10] sm:$0xff]
    %v34 = vld [vmem:[%s1 + $0x18] sm:$0xff]
    %v35 = vld [vmem:[%s2] sm:$0xff]
    %v36 = vld [vmem:[%s2 + $0x8] sm:$0xff]
    %v37 = vld [vmem:[%s2 + $0x10] sm:$0xff]
    %v38 = vld [vmem:[%s2 + $0x18] sm:$0xff]
    %40 = vset.pattern.permute.xlu0 0
    %41 = vperm.xlu0 %40, %v35
    %v42 = vpop.permute.xlu0 %41
    %45 = vset.pattern.permute.xlu0 0
    %46 = vperm.xlu0 %45, %v36
    %v47 = vpop.permute.xlu0 %46
    %50 = vset.pattern.permute.xlu0 0
    %51 = vperm.xlu0 %50, %v37
    %v52 = vpop.permute.xlu0 %51
    %55 = vset.pattern.permute.xlu0 0
    %56 = vperm.xlu0 %55, %v38
    %v57 = vpop.permute.xlu0 %56
    %v63 = vcombine.high %v27, %v27
    %v64 = vcombine.high %v28, %v28
    %v65 = vcombine.high %v29, %v29
    %v66 = vcombine.high %v30, %v30
    %vm67 = vcmask 31744
    %v69 = vsel %vm67, %v31, 0
    %v72 = vsel %vm67, %v32, 0
    %v75 = vsel %vm67, %v33, 0
    %v78 = vsel %vm67, %v34, 0
    %vm80 = vcmask 1043456
    %v81 = vsel %vm80, %v27, 0
    %v83 = vsel %vm80, %v63, 0
    %v85 = vsel %vm80, %v28, 0
    %v87 = vsel %vm80, %v64, 0
    %v89 = vsel %vm80, %v29, 0
    %v91 = vsel %vm80, %v65, 0
    %v93 = vsel %vm80, %v30, 0
    %v95 = vsel %vm80, %v66, 0
    %97 = vmatprep.subr.mxu0 %v83
    %98 = vmatpush1.msra.mxu0 %v81
    %99 = vmatprep.subr.mxu0 0.0
    %100 = vmatpush1.msra.mxu0 0.0
    %101 = vmatprep.subr.mxu0 0.0
    %102 = vmatpush1.msra.mxu0 0.0
    %103 = vmatprep.subr.mxu0 0.0
    %104 = vmatpush1.msra.mxu0 0.0
    %105 = vmatprep.subr.mxu0 0.0
    %106 = vmatpush1.msra.mxu0 0.0
    %107 = vmatprep.subr.mxu0 0.0
    %108 = vmatpush1.msra.mxu0 0.0
    %109 = vmatprep.subr.mxu0 0.0
    %110 = vmatpush1.msra.mxu0 0.0
    %111 = vmatprep.subr.mxu0 0.0
    %112 = vmatpush1.msra.mxu0 0.0
    %113 = vmatprep.subr.mxu0 0.0
    %114 = vmatpush1.msra.mxu0 0.0
    %115 = vmatprep.subr.mxu0 0.0
    %116 = vmatpush1.msra.mxu0 0.0
    %117 = vmatprep.subr.mxu0 0.0
    %118 = vmatpush1.msra.mxu0 0.0
    %119 = vmatprep.subr.mxu0 0.0
    %120 = vmatpush1.msra.mxu0 0.0
    %121 = vmatprep.subr.mxu0 0.0
    %122 = vmatpush1.msra.mxu0 0.0
    %123 = vmatprep.subr.mxu0 0.0
    %124 = vmatpush1.msra.mxu0 0.0
    %125 = vmatprep.subr.mxu0 0.0
    %126 = vmatpush1.msra.mxu0 0.0
    %127 = vmatprep.subr.mxu0 0.0
    %128 = vmatpush1.msra.mxu0 0.0
    %129 = vmatprep.subr.mxu0 0.0
    %130 = vmatpush1.msra.mxu0 0.0
    %131 = vmatprep.subr.mxu0 0.0
    %132 = vmatpush1.msra.mxu0 0.0
    %133 = vmatprep.subr.mxu0 0.0
    %134 = vmatpush1.msra.mxu0 0.0
    %135 = vmatprep.subr.mxu0 0.0
    %136 = vmatpush1.msra.mxu0 0.0
    %137 = vmatprep.subr.mxu0 0.0
    %138 = vmatpush1.msra.mxu0 0.0
    %139 = vmatprep.subr.mxu0 0.0
    %140 = vmatpush1.msra.mxu0 0.0
    %141 = vmatprep.subr.mxu0 0.0
    %142 = vmatpush1.msra.mxu0 0.0
    %143 = vmatprep.subr.mxu0 0.0
    %144 = vmatpush1.msra.mxu0 0.0
    %145 = vmatprep.subr.mxu0 0.0
    %146 = vmatpush1.msra.mxu0 0.0
    %147 = vmatprep.subr.mxu0 0.0
    %148 = vmatpush1.msra.mxu0 0.0
    %149 = vmatprep.subr.mxu0 0.0
    %150 = vmatpush1.msra.mxu0 0.0
    %151 = vmatprep.subr.mxu0 0.0
    %152 = vmatpush1.msra.mxu0 0.0
    %153 = vmatprep.subr.mxu0 0.0
    %154 = vmatpush1.msra.mxu0 0.0
    %155 = vmatprep.subr.mxu0 0.0
    %156 = vmatpush1.msra.mxu0 0.0
    %157 = vmatprep.subr.mxu0 0.0
    %158 = vmatpush1.msra.mxu0 0.0
    %159 = vmatprep.subr.mxu0 0.0
    %160 = vmatpush1.msra.mxu0 0.0
    %161 = vmatprep.mubr.f32.mxu0 0.0
    %162 = vmatmul.mubr.f32.gmra.mrb[0].mxu0 %v69
    %v163 = vpop.f32.mrb[0].mxu0
    %v164 = vadd.f32 %v42, %v163
    %v165 = vpop.f32.mrb[0].mxu0
    %v166 = vadd.f32 %v42, %v165
    %167 = vmatprep.mubr.f32.mxu0 0.0
    %168 = vmatmul.mubr.f32.gmra.mrb[0].mxu0 %v72
    %v169 = vpop.f32.mrb[0].mxu0
    %v170 = vadd.f32 %v47, %v169
    %v171 = vpop.f32.mrb[0].mxu0
    %v172 = vadd.f32 %v47, %v171
    %173 = vmatprep.mubr.f32.mxu0 0.0
    %174 = vmatmul.mubr.f32.gmra.mrb[0].mxu0 %v75
    %v175 = vpop.f32.mrb[0].mxu0
    %v176 = vadd.f32 %v52, %v175
    %v177 = vpop.f32.mrb[0].mxu0
    %v178 = vadd.f32 %v52, %v177
    %179 = vmatprep.mubr.f32.mxu0 0.0
    %180 = vmatmul.mubr.f32.gmra.mrb[0].mxu0 %v78
    %v181 = vpop.f32.mrb[0].mxu0
    %v182 = vadd.f32 %v57, %v181
    %v183 = vpop.f32.mrb[0].mxu0
    %v184 = vadd.f32 %v57, %v183
    %185 = vdwg.mxu0
    %186 = vmatprep.subr.mxu0 %v87
    %187 = vmatpush1.msra.mxu0 %v85
    %188 = vmatprep.subr.mxu0 0.0
    %189 = vmatpush1.msra.mxu0 0.0
    %190 = vmatprep.subr.mxu0 0.0
    %191 = vmatpush1.msra.mxu0 0.0
    %192 = vmatprep.subr.mxu0 0.0
    %193 = vmatpush1.msra.mxu0 0.0
    %194 = vmatprep.subr.mxu0 0.0
    %195 = vmatpush1.msra.mxu0 0.0
    %196 = vmatprep.subr.mxu0 0.0
    %197 = vmatpush1.msra.mxu0 0.0
    %198 = vmatprep.subr.mxu0 0.0
    %199 = vmatpush1.msra.mxu0 0.0
    %200 = vmatprep.subr.mxu0 0.0
    %201 = vmatpush1.msra.mxu0 0.0
    %202 = vmatprep.subr.mxu0 0.0
    %203 = vmatpush1.msra.mxu0 0.0
    %204 = vmatprep.subr.mxu0 0.0
    %205 = vmatpush1.msra.mxu0 0.0
    %206 = vmatprep.subr.mxu0 0.0
    %207 = vmatpush1.msra.mxu0 0.0
    %208 = vmatprep.subr.mxu0 0.0
    %209 = vmatpush1.msra.mxu0 0.0
    %210 = vmatprep.subr.mxu0 0.0
    %211 = vmatpush1.msra.mxu0 0.0
    %212 = vmatprep.subr.mxu0 0.0
    %213 = vmatpush1.msra.mxu0 0.0
    %214 = vmatprep.subr.mxu0 0.0
    %215 = vmatpush1.msra.mxu0 0.0
    %216 = vmatprep.subr.mxu0 0.0
    %217 = vmatpush1.msra.mxu0 0.0
    %218 = vmatprep.subr.mxu0 0.0
    %219 = vmatpush1.msra.mxu0 0.0
    %220 = vmatprep.subr.mxu0 0.0
    %221 = vmatpush1.msra.mxu0 0.0
    %222 = vmatprep.subr.mxu0 0.0
    %223 = vmatpush1.msra.mxu0 0.0
    %224 = vmatprep.subr.mxu0 0.0
    %225 = vmatpush1.msra.mxu0 0.0
    %226 = vmatprep.subr.mxu0 0.0
    %227 = vmatpush1.msra.mxu0 0.0
    %228 = vmatprep.subr.mxu0 0.0
    %229 = vmatpush1.msra.mxu0 0.0
    %230 = vmatprep.subr.mxu0 0.0
    %231 = vmatpush1.msra.mxu0 0.0
    %232 = vmatprep.subr.mxu0 0.0
    %233 = vmatpush1.msra.mxu0 0.0
    %234 = vmatprep.subr.mxu0 0.0
    %235 = vmatpush1.msra.mxu0 0.0
    %236 = vmatprep.subr.mxu0 0.0
    %237 = vmatpush1.msra.mxu0 0.0
    %238 = vmatprep.subr.mxu0 0.0
    %239 = vmatpush1.msra.mxu0 0.0
    %240 = vmatprep.subr.mxu0 0.0
    %241 = vmatpush1.msra.mxu0 0.0
    %242 = vmatprep.subr.mxu0 0.0
    %243 = vmatpush1.msra.mxu0 0.0
    %244 = vmatprep.subr.mxu0 0.0
    %245 = vmatpush1.msra.mxu0 0.0
    %246 = vmatprep.subr.mxu0 0.0
    %247 = vmatpush1.msra.mxu0 0.0
    %248 = vmatprep.subr.mxu0 0.0
    %249 = vmatpush1.msra.mxu0 0.0
    %250 = vmatprep.mubr.f32.mxu0 0.0
    %251 = vmatmul.mubr.f32.gmra.mrb[0].mxu0 %v69
    %v252 = vpop.f32.mrb[0].mxu0
    %v253 = vadd.f32 %v42, %v252
    %v254 = vpop.f32.mrb[0].mxu0
    %v255 = vadd.f32 %v42, %v254
    %256 = vmatprep.mubr.f32.mxu0 0.0
    %257 = vmatmul.mubr.f32.gmra.mrb[0].mxu0 %v72
    %v258 = vpop.f32.mrb[0].mxu0
    %v259 = vadd.f32 %v47, %v258
    %v260 = vpop.f32.mrb[0].mxu0
    %v261 = vadd.f32 %v47, %v260
    %262 = vmatprep.mubr.f32.mxu0 0.0
    %263 = vmatmul.mubr.f32.gmra.mrb[0].mxu0 %v75
    %v264 = vpop.f32.mrb[0].mxu0
    %v265 = vadd.f32 %v52, %v264
    %v266 = vpop.f32.mrb[0].mxu0
    %v267 = vadd.f32 %v52, %v266
    %268 = vmatprep.mubr.f32.mxu0 0.0
    %269 = vmatmul.mubr.f32.gmra.mrb[0].mxu0 %v78
    %v270 = vpop.f32.mrb[0].mxu0
    %v271 = vadd.f32 %v57, %v270
    %v272 = vpop.f32.mrb[0].mxu0
    %v273 = vadd.f32 %v57, %v272
    %274 = vdwg.mxu0
    %275 = vmatprep.subr.mxu0 %v91
    %276 = vmatpush1.msra.mxu0 %v89
    %277 = vmatprep.subr.mxu0 0.0
    %278 = vmatpush1.msra.mxu0 0.0
    %279 = vmatprep.subr.mxu0 0.0
    %280 = vmatpush1.msra.mxu0 0.0
    %281 = vmatprep.subr.mxu0 0.0
    %282 = vmatpush1.msra.mxu0 0.0
    %283 = vmatprep.subr.mxu0 0.0
    %284 = vmatpush1.msra.mxu0 0.0
    %285 = vmatprep.subr.mxu0 0.0
    %286 = vmatpush1.msra.mxu0 0.0
    %287 = vmatprep.subr.mxu0 0.0
    %288 = vmatpush1.msra.mxu0 0.0
    %289 = vmatprep.subr.mxu0 0.0
    %290 = vmatpush1.msra.mxu0 0.0
    %291 = vmatprep.subr.mxu0 0.0
    %292 = vmatpush1.msra.mxu0 0.0
    %293 = vmatprep.subr.mxu0 0.0
    %294 = vmatpush1.msra.mxu0 0.0
    %295 = vmatprep.subr.mxu0 0.0
    %296 = vmatpush1.msra.mxu0 0.0
    %297 = vmatprep.subr.mxu0 0.0
    %298 = vmatpush1.msra.mxu0 0.0
    %299 = vmatprep.subr.mxu0 0.0
    %300 = vmatpush1.msra.mxu0 0.0
    %301 = vmatprep.subr.mxu0 0.0
    %302 = vmatpush1.msra.mxu0 0.0
    %303 = vmatprep.subr.mxu0 0.0
    %304 = vmatpush1.msra.mxu0 0.0
    %305 = vmatprep.subr.mxu0 0.0
    %306 = vmatpush1.msra.mxu0 0.0
    %307 = vmatprep.subr.mxu0 0.0
    %308 = vmatpush1.msra.mxu0 0.0
    %309 = vmatprep.subr.mxu0 0.0
    %310 = vmatpush1.msra.mxu0 0.0
    %311 = vmatprep.subr.mxu0 0.0
    %312 = vmatpush1.msra.mxu0 0.0
    %313 = vmatprep.subr.mxu0 0.0
    %314 = vmatpush1.msra.mxu0 0.0
    %315 = vmatprep.subr.mxu0 0.0
    %316 = vmatpush1.msra.mxu0 0.0
    %317 = vmatprep.subr.mxu0 0.0
    %318 = vmatpush1.msra.mxu0 0.0
    %319 = vmatprep.subr.mxu0 0.0
    %320 = vmatpush1.msra.mxu0 0.0
    %321 = vmatprep.subr.mxu0 0.0
    %322 = vmatpush1.msra.mxu0 0.0
    %323 = vmatprep.subr.mxu0 0.0
    %324 = vmatpush1.msra.mxu0 0.0
    %325 = vmatprep.subr.mxu0 0.0
    %326 = vmatpush1.msra.mxu0 0.0
    %327 = vmatprep.subr.mxu0 0.0
    %328 = vmatpush1.msra.mxu0 0.0
    %329 = vmatprep.subr.mxu0 0.0
    %330 = vmatpush1.msra.mxu0 0.0
    %331 = vmatprep.subr.mxu0 0.0
    %332 = vmatpush1.msra.mxu0 0.0
    %333 = vmatprep.subr.mxu0 0.0
    %334 = vmatpush1.msra.mxu0 0.0
    %335 = vmatprep.subr.mxu0 0.0
    %336 = vmatpush1.msra.mxu0 0.0
    %337 = vmatprep.subr.mxu0 0.0
    %338 = vmatpush1.msra.mxu0 0.0
    %339 = vmatprep.mubr.f32.mxu0 0.0
    %340 = vmatmul.mubr.f32.gmra.mrb[0].mxu0 %v69
    %v341 = vpop.f32.mrb[0].mxu0
    %v342 = vadd.f32 %v42, %v341
    %v343 = vpop.f32.mrb[0].mxu0
    %v344 = vadd.f32 %v42, %v343
    %345 = vmatprep.mubr.f32.mxu0 0.0
    %346 = vmatmul.mubr.f32.gmra.mrb[0].mxu0 %v72
    %v347 = vpop.f32.mrb[0].mxu0
    %v348 = vadd.f32 %v47, %v347
    %v349 = vpop.f32.mrb[0].mxu0
    %v350 = vadd.f32 %v47, %v349
    %351 = vmatprep.mubr.f32.mxu0 0.0
    %352 = vmatmul.mubr.f32.gmra.mrb[0].mxu0 %v75
    %v353 = vpop.f32.mrb[0].mxu0
    %v354 = vadd.f32 %v52, %v353
    %v355 = vpop.f32.mrb[0].mxu0
    %v356 = vadd.f32 %v52, %v355
    %357 = vmatprep.mubr.f32.mxu0 0.0
    %358 = vmatmul.mubr.f32.gmra.mrb[0].mxu0 %v78
    %v359 = vpop.f32.mrb[0].mxu0
    %v360 = vadd.f32 %v57, %v359
    %v361 = vpop.f32.mrb[0].mxu0
    %v362 = vadd.f32 %v57, %v361
    %363 = vdwg.mxu0
    %364 = vmatprep.subr.mxu0 %v95
    %365 = vmatpush1.msra.mxu0 %v93
    %366 = vmatprep.subr.mxu0 0.0
    %367 = vmatpush1.msra.mxu0 0.0
    %368 = vmatprep.subr.mxu0 0.0
    %369 = vmatpush1.msra.mxu0 0.0
    %370 = vmatprep.subr.mxu0 0.0
    %371 = vmatpush1.msra.mxu0 0.0
    %372 = vmatprep.subr.mxu0 0.0
    %373 = vmatpush1.msra.mxu0 0.0
    %374 = vmatprep.subr.mxu0 0.0
    %375 = vmatpush1.msra.mxu0 0.0
    %376 = vmatprep.subr.mxu0 0.0
    %377 = vmatpush1.msra.mxu0 0.0
    %378 = vmatprep.subr.mxu0 0.0
    %379 = vmatpush1.msra.mxu0 0.0
    %380 = vmatprep.subr.mxu0 0.0
    %381 = vmatpush1.msra.mxu0 0.0
    %382 = vmatprep.subr.mxu0 0.0
    %383 = vmatpush1.msra.mxu0 0.0
    %384 = vmatprep.subr.mxu0 0.0
    %385 = vmatpush1.msra.mxu0 0.0
    %386 = vmatprep.subr.mxu0 0.0
    %387 = vmatpush1.msra.mxu0 0.0
    %388 = vmatprep.subr.mxu0 0.0
    %389 = vmatpush1.msra.mxu0 0.0
    %390 = vmatprep.subr.mxu0 0.0
    %391 = vmatpush1.msra.mxu0 0.0
    %392 = vmatprep.subr.mxu0 0.0
    %393 = vmatpush1.msra.mxu0 0.0
    %394 = vmatprep.subr.mxu0 0.0
    %395 = vmatpush1.msra.mxu0 0.0
    %396 = vmatprep.subr.mxu0 0.0
    %397 = vmatpush1.msra.mxu0 0.0
    %398 = vmatprep.subr.mxu0 0.0
    %399 = vmatpush1.msra.mxu0 0.0
    %400 = vmatprep.subr.mxu0 0.0
    %401 = vmatpush1.msra.mxu0 0.0
    %402 = vmatprep.subr.mxu0 0.0
    %403 = vmatpush1.msra.mxu0 0.0
    %404 = vmatprep.subr.mxu0 0.0
    %405 = vmatpush1.msra.mxu0 0.0
    %406 = vmatprep.subr.mxu0 0.0
    %407 = vmatpush1.msra.mxu0 0.0
    %408 = vmatprep.subr.mxu0 0.0
    %409 = vmatpush1.msra.mxu0 0.0
    %410 = vmatprep.subr.mxu0 0.0
    %411 = vmatpush1.msra.mxu0 0.0
    %412 = vmatprep.subr.mxu0 0.0
    %413 = vmatpush1.msra.mxu0 0.0
    %414 = vmatprep.subr.mxu0 0.0
    %415 = vmatpush1.msra.mxu0 0.0
    %416 = vmatprep.subr.mxu0 0.0
    %417 = vmatpush1.msra.mxu0 0.0
    %418 = vmatprep.subr.mxu0 0.0
    %419 = vmatpush1.msra.mxu0 0.0
    %420 = vmatprep.subr.mxu0 0.0
    %421 = vmatpush1.msra.mxu0 0.0
    %422 = vmatprep.subr.mxu0 0.0
    %423 = vmatpush1.msra.mxu0 0.0
    %424 = vmatprep.subr.mxu0 0.0
    %425 = vmatpush1.msra.mxu0 0.0
    %426 = vmatprep.subr.mxu0 0.0
    %427 = vmatpush1.msra.mxu0 0.0
    %428 = vmatprep.mubr.f32.mxu0 0.0
    %429 = vmatmul.mubr.f32.gmra.mrb[0].mxu0 %v69
    %v430 = vpop.f32.mrb[0].mxu0
    %v431 = vadd.f32 %v42, %v430
    %v432 = vpop.f32.mrb[0].mxu0
    %v433 = vadd.f32 %v42, %v432
    %434 = vmatprep.mubr.f32.mxu0 0.0
    %435 = vmatmul.mubr.f32.gmra.mrb[0].mxu0 %v72
    %v436 = vpop.f32.mrb[0].mxu0
    %v437 = vadd.f32 %v47, %v436
    %v438 = vpop.f32.mrb[0].mxu0
    %v439 = vadd.f32 %v47, %v438
    %440 = vmatprep.mubr.f32.mxu0 0.0
    %441 = vmatmul.mubr.f32.gmra.mrb[0].mxu0 %v75
    %v442 = vpop.f32.mrb[0].mxu0
    %v443 = vadd.f32 %v52, %v442
    %v444 = vpop.f32.mrb[0].mxu0
    %v445 = vadd.f32 %v52, %v444
    %446 = vmatprep.mubr.f32.mxu0 0.0
    %447 = vmatmul.mubr.f32.gmra.mrb[0].mxu0 %v78
    %v448 = vpop.f32.mrb[0].mxu0
    %v449 = vadd.f32 %v57, %v448
    %v450 = vpop.f32.mrb[0].mxu0
    %v451 = vadd.f32 %v57, %v450
    %452 = vdwg.mxu0
    %v453 = vtanh.pop %v164
    %v454 = vtanh.pop %v166
    %v455 = vtanh.pop %v253
    %v456 = vtanh.pop %v255
    %v457 = vtanh.pop %v342
    %v458 = vtanh.pop %v344
    %v459 = vtanh.pop %v431
    %v460 = vtanh.pop %v433
    %v461 = vtanh.pop %v170
    %v462 = vtanh.pop %v172
    %v463 = vtanh.pop %v259
    %v464 = vtanh.pop %v261
    %v465 = vtanh.pop %v348
    %v466 = vtanh.pop %v350
    %v467 = vtanh.pop %v437
    %v468 = vtanh.pop %v439
    %v469 = vtanh.pop %v176
    %v470 = vtanh.pop %v178
    %v471 = vtanh.pop %v265
    %v472 = vtanh.pop %v267
    %v473 = vtanh.pop %v354
    %v474 = vtanh.pop %v356
    %v475 = vtanh.pop %v443
    %v476 = vtanh.pop %v445
    %v477 = vtanh.pop %v182
    %v478 = vtanh.pop %v184
    %v479 = vtanh.pop %v271
    %v480 = vtanh.pop %v273
    %v481 = vtanh.pop %v360
    %v482 = vtanh.pop %v362
    %v483 = vtanh.pop %v449
    %v484 = vtanh.pop %v451
    %v485 = vld [vmem:[%s3] sm:$0xff]
    %v486 = vld [vmem:[%s3 + $0x8] sm:$0xff]
    %v487 = vld [vmem:[%s3 + $0x10] sm:$0xff]
    %v488 = vld [vmem:[%s3 + $0x18] sm:$0xff]
    %v489 = vld [vmem:[%s4] sm:$0xff]
    %v490 = vld [vmem:[%s4 + $0x8] sm:$0xff]
    %v491 = vld [vmem:[%s4 + $0x10] sm:$0xff]
    %v492 = vld [vmem:[%s4 + $0x18] sm:$0xff]
    %494 = vset.pattern.permute.xlu0 0
    %495 = vperm.xlu0 %494, %v489
    %v496 = vpop.permute.xlu0 %495
    %499 = vset.pattern.permute.xlu0 0
    %500 = vperm.xlu0 %499, %v490
    %v501 = vpop.permute.xlu0 %500
    %504 = vset.pattern.permute.xlu0 0
    %505 = vperm.xlu0 %504, %v491
    %v506 = vpop.permute.xlu0 %505
    %509 = vset.pattern.permute.xlu0 0
    %510 = vperm.xlu0 %509, %v492
    %v511 = vpop.permute.xlu0 %510
    %vm513 = vcmask 261120
    %v515 = vsel %vm513, %v485, 0
    %v518 = vsel %vm513, %v486, 0
    %v521 = vsel %vm513, %v487, 0
    %v524 = vsel %vm513, %v488, 0
    %526 = vmatprep.subr.mxu0 %v454
    %527 = vmatpush1.msra.mxu0 %v453
    %528 = vmatprep.subr.mxu0 %v462
    %529 = vmatpush1.msra.mxu0 %v461
    %530 = vmatprep.subr.mxu0 %v470
    %531 = vmatpush1.msra.mxu0 %v469
    %532 = vmatprep.subr.mxu0 %v478
    %533 = vmatpush1.msra.mxu0 %v477
    %534 = vmatprep.subr.mxu0 0.0
    %535 = vmatpush1.msra.mxu0 0.0
    %536 = vmatprep.subr.mxu0 0.0
    %537 = vmatpush1.msra.mxu0 0.0
    %538 = vmatprep.subr.mxu0 0.0
    %539 = vmatpush1.msra.mxu0 0.0
    %540 = vmatprep.subr.mxu0 0.0
    %541 = vmatpush1.msra.mxu0 0.0
    %542 = vmatprep.subr.mxu0 0.0
    %543 = vmatpush1.msra.mxu0 0.0
    %544 = vmatprep.subr.mxu0 0.0
    %545 = vmatpush1.msra.mxu0 0.0
    %546 = vmatprep.subr.mxu0 0.0
    %547 = vmatpush1.msra.mxu0 0.0
    %548 = vmatprep.subr.mxu0 0.0
    %549 = vmatpush1.msra.mxu0 0.0
    %550 = vmatprep.subr.mxu0 0.0
    %551 = vmatpush1.msra.mxu0 0.0
    %552 = vmatprep.subr.mxu0 0.0
    %553 = vmatpush1.msra.mxu0 0.0
    %554 = vmatprep.subr.mxu0 0.0
    %555 = vmatpush1.msra.mxu0 0.0
    %556 = vmatprep.subr.mxu0 0.0
    %557 = vmatpush1.msra.mxu0 0.0
    %558 = vmatprep.subr.mxu0 0.0
    %559 = vmatpush1.msra.mxu0 0.0
    %560 = vmatprep.subr.mxu0 0.0
    %561 = vmatpush1.msra.mxu0 0.0
    %562 = vmatprep.subr.mxu0 0.0
    %563 = vmatpush1.msra.mxu0 0.0
    %564 = vmatprep.subr.mxu0 0.0
    %565 = vmatpush1.msra.mxu0 0.0
    %566 = vmatprep.subr.mxu0 0.0
    %567 = vmatpush1.msra.mxu0 0.0
    %568 = vmatprep.subr.mxu0 0.0
    %569 = vmatpush1.msra.mxu0 0.0
    %570 = vmatprep.subr.mxu0 0.0
    %571 = vmatpush1.msra.mxu0 0.0
    %572 = vmatprep.subr.mxu0 0.0
    %573 = vmatpush1.msra.mxu0 0.0
    %574 = vmatprep.subr.mxu0 0.0
    %575 = vmatpush1.msra.mxu0 0.0
    %576 = vmatprep.subr.mxu0 0.0
    %577 = vmatpush1.msra.mxu0 0.0
    %578 = vmatprep.subr.mxu0 0.0
    %579 = vmatpush1.msra.mxu0 0.0
    %580 = vmatprep.subr.mxu0 0.0
    %581 = vmatpush1.msra.mxu0 0.0
    %582 = vmatprep.subr.mxu0 0.0
    %583 = vmatpush1.msra.mxu0 0.0
    %584 = vmatprep.subr.mxu0 0.0
    %585 = vmatpush1.msra.mxu0 0.0
    %586 = vmatprep.subr.mxu0 0.0
    %587 = vmatpush1.msra.mxu0 0.0
    %588 = vmatprep.subr.mxu0 0.0
    %589 = vmatpush1.msra.mxu0 0.0
    %590 = vmatprep.mubr.f32.mxu0 0.0
    %591 = vmatmul.mubr.f32.gmra.mrb[0].mxu0 %v515
    %v592 = vpop.f32.mrb[0].mxu0
    %v593 = vadd.f32 %v496, %v592
    %v594 = vpop.f32.mrb[0].mxu0
    %v595 = vadd.f32 %v496, %v594
    %596 = vmatprep.mubr.f32.mxu0 0.0
    %597 = vmatmul.mubr.f32.gmra.mrb[0].mxu0 %v518
    %v598 = vpop.f32.mrb[0].mxu0
    %v599 = vadd.f32 %v501, %v598
    %v600 = vpop.f32.mrb[0].mxu0
    %v601 = vadd.f32 %v501, %v600
    %602 = vmatprep.mubr.f32.mxu0 0.0
    %603 = vmatmul.mubr.f32.gmra.mrb[0].mxu0 %v521
    %v604 = vpop.f32.mrb[0].mxu0
    %v605 = vadd.f32 %v506, %v604
    %v606 = vpop.f32.mrb[0].mxu0
    %v607 = vadd.f32 %v506, %v606
    %608 = vmatprep.mubr.f32.mxu0 0.0
    %609 = vmatmul.mubr.f32.gmra.mrb[0].mxu0 %v524
    %v610 = vpop.f32.mrb[0].mxu0
    %v611 = vadd.f32 %v511, %v610
    %v612 = vpop.f32.mrb[0].mxu0
    %v613 = vadd.f32 %v511, %v612
    %614 = vdwg.mxu0
    %615 = vmatprep.subr.mxu0 %v456
    %616 = vmatpush1.msra.mxu0 %v455
    %617 = vmatprep.subr.mxu0 %v464
    %618 = vmatpush1.msra.mxu0 %v463
    %619 = vmatprep.subr.mxu0 %v472
    %620 = vmatpush1.msra.mxu0 %v471
    %621 = vmatprep.subr.mxu0 %v480
    %622 = vmatpush1.msra.mxu0 %v479
    %623 = vmatprep.subr.mxu0 0.0
    %624 = vmatpush1.msra.mxu0 0.0
    %625 = vmatprep.subr.mxu0 0.0
    %626 = vmatpush1.msra.mxu0 0.0
    %627 = vmatprep.subr.mxu0 0.0
    %628 = vmatpush1.msra.mxu0 0.0
    %629 = vmatprep.subr.mxu0 0.0
    %630 = vmatpush1.msra.mxu0 0.0
    %631 = vmatprep.subr.mxu0 0.0
    %632 = vmatpush1.msra.mxu0 0.0
    %633 = vmatprep.subr.mxu0 0.0
    %634 = vmatpush1.msra.mxu0 0.0
    %635 = vmatprep.subr.mxu0 0.0
    %636 = vmatpush1.msra.mxu0 0.0
    %637 = vmatprep.subr.mxu0 0.0
    %638 = vmatpush1.msra.mxu0 0.0
    %639 = vmatprep.subr.mxu0 0.0
    %640 = vmatpush1.msra.mxu0 0.0
    %641 = vmatprep.subr.mxu0 0.0
    %642 = vmatpush1.msra.mxu0 0.0
    %643 = vmatprep.subr.mxu0 0.0
    %644 = vmatpush1.msra.mxu0 0.0
    %645 = vmatprep.subr.mxu0 0.0
    %646 = vmatpush1.msra.mxu0 0.0
    %647 = vmatprep.subr.mxu0 0.0
    %648 = vmatpush1.msra.mxu0 0.0
    %649 = vmatprep.subr.mxu0 0.0
    %650 = vmatpush1.msra.mxu0 0.0
    %651 = vmatprep.subr.mxu0 0.0
    %652 = vmatpush1.msra.mxu0 0.0
    %653 = vmatprep.subr.mxu0 0.0
    %654 = vmatpush1.msra.mxu0 0.0
    %655 = vmatprep.subr.mxu0 0.0
    %656 = vmatpush1.msra.mxu0 0.0
    %657 = vmatprep.subr.mxu0 0.0
    %658 = vmatpush1.msra.mxu0 0.0
    %659 = vmatprep.subr.mxu0 0.0
    %660 = vmatpush1.msra.mxu0 0.0
    %661 = vmatprep.subr.mxu0 0.0
    %662 = vmatpush1.msra.mxu0 0.0
    %663 = vmatprep.subr.mxu0 0.0
    %664 = vmatpush1.msra.mxu0 0.0
    %665 = vmatprep.subr.mxu0 0.0
    %666 = vmatpush1.msra.mxu0 0.0
    %667 = vmatprep.subr.mxu0 0.0
    %668 = vmatpush1.msra.mxu0 0.0
    %669 = vmatprep.subr.mxu0 0.0
    %670 = vmatpush1.msra.mxu0 0.0
    %671 = vmatprep.subr.mxu0 0.0
    %672 = vmatpush1.msra.mxu0 0.0
    %673 = vmatprep.subr.mxu0 0.0
    %674 = vmatpush1.msra.mxu0 0.0
    %675 = vmatprep.subr.mxu0 0.0
    %676 = vmatpush1.msra.mxu0 0.0
    %677 = vmatprep.subr.mxu0 0.0
    %678 = vmatpush1.msra.mxu0 0.0
    %679 = vmatprep.mubr.f32.mxu0 0.0
    %680 = vmatmul.mubr.f32.gmra.mrb[0].mxu0 %v515
    %v681 = vpop.f32.mrb[0].mxu0
    %v682 = vadd.f32 %v496, %v681
    %v683 = vpop.f32.mrb[0].mxu0
    %v684 = vadd.f32 %v496, %v683
    %685 = vmatprep.mubr.f32.mxu0 0.0
    %686 = vmatmul.mubr.f32.gmra.mrb[0].mxu0 %v518
    %v687 = vpop.f32.mrb[0].mxu0
    %v688 = vadd.f32 %v501, %v687
    %v689 = vpop.f32.mrb[0].mxu0
    %v690 = vadd.f32 %v501, %v689
    %691 = vmatprep.mubr.f32.mxu0 0.0
    %692 = vmatmul.mubr.f32.gmra.mrb[0].mxu0 %v521
    %v693 = vpop.f32.mrb[0].mxu0
    %v694 = vadd.f32 %v506, %v693
    %v695 = vpop.f32.mrb[0].mxu0
    %v696 = vadd.f32 %v506, %v695
    %697 = vmatprep.mubr.f32.mxu0 0.0
    %698 = vmatmul.mubr.f32.gmra.mrb[0].mxu0 %v524
    %v699 = vpop.f32.mrb[0].mxu0
    %v700 = vadd.f32 %v511, %v699
    %v701 = vpop.f32.mrb[0].mxu0
    %v702 = vadd.f32 %v511, %v701
    %703 = vdwg.mxu0
    %704 = vmatprep.subr.mxu0 %v458
    %705 = vmatpush1.msra.mxu0 %v457
    %706 = vmatprep.subr.mxu0 %v466
    %707 = vmatpush1.msra.mxu0 %v465
    %708 = vmatprep.subr.mxu0 %v474
    %709 = vmatpush1.msra.mxu0 %v473
    %710 = vmatprep.subr.mxu0 %v482
    %711 = vmatpush1.msra.mxu0 %v481
    %712 = vmatprep.subr.mxu0 0.0
    %713 = vmatpush1.msra.mxu0 0.0
    %714 = vmatprep.subr.mxu0 0.0
    %715 = vmatpush1.msra.mxu0 0.0
    %716 = vmatprep.subr.mxu0 0.0
    %717 = vmatpush1.msra.mxu0 0.0
    %718 = vmatprep.subr.mxu0 0.0
    %719 = vmatpush1.msra.mxu0 0.0
    %720 = vmatprep.subr.mxu0 0.0
    %721 = vmatpush1.msra.mxu0 0.0
    %722 = vmatprep.subr.mxu0 0.0
    %723 = vmatpush1.msra.mxu0 0.0
    %724 = vmatprep.subr.mxu0 0.0
    %725 = vmatpush1.msra.mxu0 0.0
    %726 = vmatprep.subr.mxu0 0.0
    %727 = vmatpush1.msra.mxu0 0.0
    %728 = vmatprep.subr.mxu0 0.0
    %729 = vmatpush1.msra.mxu0 0.0
    %730 = vmatprep.subr.mxu0 0.0
    %731 = vmatpush1.msra.mxu0 0.0
    %732 = vmatprep.subr.mxu0 0.0
    %733 = vmatpush1.msra.mxu0 0.0
    %734 = vmatprep.subr.mxu0 0.0
    %735 = vmatpush1.msra.mxu0 0.0
    %736 = vmatprep.subr.mxu0 0.0
    %737 = vmatpush1.msra.mxu0 0.0
    %738 = vmatprep.subr.mxu0 0.0
    %739 = vmatpush1.msra.mxu0 0.0
    %740 = vmatprep.subr.mxu0 0.0
    %741 = vmatpush1.msra.mxu0 0.0
    %742 = vmatprep.subr.mxu0 0.0
    %743 = vmatpush1.msra.mxu0 0.0
    %744 = vmatprep.subr.mxu0 0.0
    %745 = vmatpush1.msra.mxu0 0.0
    %746 = vmatprep.subr.mxu0 0.0
    %747 = vmatpush1.msra.mxu0 0.0
    %748 = vmatprep.subr.mxu0 0.0
    %749 = vmatpush1.msra.mxu0 0.0
    %750 = vmatprep.subr.mxu0 0.0
    %751 = vmatpush1.msra.mxu0 0.0
    %752 = vmatprep.subr.mxu0 0.0
    %753 = vmatpush1.msra.mxu0 0.0
    %754 = vmatprep.subr.mxu0 0.0
    %755 = vmatpush1.msra.mxu0 0.0
    %756 = vmatprep.subr.mxu0 0.0
    %757 = vmatpush1.msra.mxu0 0.0
    %758 = vmatprep.subr.mxu0 0.0
    %759 = vmatpush1.msra.mxu0 0.0
    %760 = vmatprep.subr.mxu0 0.0
    %761 = vmatpush1.msra.mxu0 0.0
    %762 = vmatprep.subr.mxu0 0.0
    %763 = vmatpush1.msra.mxu0 0.0
    %764 = vmatprep.subr.mxu0 0.0
    %765 = vmatpush1.msra.mxu0 0.0
    %766 = vmatprep.subr.mxu0 0.0
    %767 = vmatpush1.msra.mxu0 0.0
    %768 = vmatprep.mubr.f32.mxu0 0.0
    %769 = vmatmul.mubr.f32.gmra.mrb[0].mxu0 %v515
    %v770 = vpop.f32.mrb[0].mxu0
    %v771 = vadd.f32 %v496, %v770
    %v772 = vpop.f32.mrb[0].mxu0
    %v773 = vadd.f32 %v496, %v772
    %774 = vmatprep.mubr.f32.mxu0 0.0
    %775 = vmatmul.mubr.f32.gmra.mrb[0].mxu0 %v518
    %v776 = vpop.f32.mrb[0].mxu0
    %v777 = vadd.f32 %v501, %v776
    %v778 = vpop.f32.mrb[0].mxu0
    %v779 = vadd.f32 %v501, %v778
    %780 = vmatprep.mubr.f32.mxu0 0.0
    %781 = vmatmul.mubr.f32.gmra.mrb[0].mxu0 %v521
    %v782 = vpop.f32.mrb[0].mxu0
    %v783 = vadd.f32 %v506, %v782
    %v784 = vpop.f32.mrb[0].mxu0
    %v785 = vadd.f32 %v506, %v784
    %786 = vmatprep.mubr.f32.mxu0 0.0
    %787 = vmatmul.mubr.f32.gmra.mrb[0].mxu0 %v524
    %v788 = vpop.f32.mrb[0].mxu0
    %v789 = vadd.f32 %v511, %v788
    %v790 = vpop.f32.mrb[0].mxu0
    %v791 = vadd.f32 %v511, %v790
    %792 = vdwg.mxu0
    %793 = vmatprep.subr.mxu0 %v460
    %794 = vmatpush1.msra.mxu0 %v459
    %795 = vmatprep.subr.mxu0 %v468
    %796 = vmatpush1.msra.mxu0 %v467
    %797 = vmatprep.subr.mxu0 %v476
    %798 = vmatpush1.msra.mxu0 %v475
    %799 = vmatprep.subr.mxu0 %v484
    %800 = vmatpush1.msra.mxu0 %v483
    %801 = vmatprep.subr.mxu0 0.0
    %802 = vmatpush1.msra.mxu0 0.0
    %803 = vmatprep.subr.mxu0 0.0
    %804 = vmatpush1.msra.mxu0 0.0
    %805 = vmatprep.subr.mxu0 0.0
    %806 = vmatpush1.msra.mxu0 0.0
    %807 = vmatprep.subr.mxu0 0.0
    %808 = vmatpush1.msra.mxu0 0.0
    %809 = vmatprep.subr.mxu0 0.0
    %810 = vmatpush1.msra.mxu0 0.0
    %811 = vmatprep.subr.mxu0 0.0
    %812 = vmatpush1.msra.mxu0 0.0
    %813 = vmatprep.subr.mxu0 0.0
    %814 = vmatpush1.msra.mxu0 0.0
    %815 = vmatprep.subr.mxu0 0.0
    %816 = vmatpush1.msra.mxu0 0.0
    %817 = vmatprep.subr.mxu0 0.0
    %818 = vmatpush1.msra.mxu0 0.0
    %819 = vmatprep.subr.mxu0 0.0
    %820 = vmatpush1.msra.mxu0 0.0
    %821 = vmatprep.subr.mxu0 0.0
    %822 = vmatpush1.msra.mxu0 0.0
    %823 = vmatprep.subr.mxu0 0.0
    %824 = vmatpush1.msra.mxu0 0.0
    %825 = vmatprep.subr.mxu0 0.0
    %826 = vmatpush1.msra.mxu0 0.0
    %827 = vmatprep.subr.mxu0 0.0
    %828 = vmatpush1.msra.mxu0 0.0
    %829 = vmatprep.subr.mxu0 0.0
    %830 = vmatpush1.msra.mxu0 0.0
    %831 = vmatprep.subr.mxu0 0.0
    %832 = vmatpush1.msra.mxu0 0.0
    %833 = vmatprep.subr.mxu0 0.0
    %834 = vmatpush1.msra.mxu0 0.0
    %835 = vmatprep.subr.mxu0 0.0
    %836 = vmatpush1.msra.mxu0 0.0
    %837 = vmatprep.subr.mxu0 0.0
    %838 = vmatpush1.msra.mxu0 0.0
    %839 = vmatprep.subr.mxu0 0.0
    %840 = vmatpush1.msra.mxu0 0.0
    %841 = vmatprep.subr.mxu0 0.0
    %842 = vmatpush1.msra.mxu0 0.0
    %843 = vmatprep.subr.mxu0 0.0
    %844 = vmatpush1.msra.mxu0 0.0
    %845 = vmatprep.subr.mxu0 0.0
    %846 = vmatpush1.msra.mxu0 0.0
    %847 = vmatprep.subr.mxu0 0.0
    %848 = vmatpush1.msra.mxu0 0.0
    %849 = vmatprep.subr.mxu0 0.0
    %850 = vmatpush1.msra.mxu0 0.0
    %851 = vmatprep.subr.mxu0 0.0
    %852 = vmatpush1.msra.mxu0 0.0
    %853 = vmatprep.subr.mxu0 0.0
    %854 = vmatpush1.msra.mxu0 0.0
    %855 = vmatprep.subr.mxu0 0.0
    %856 = vmatpush1.msra.mxu0 0.0
    %857 = vmatprep.mubr.f32.mxu0 0.0
    %858 = vmatmul.mubr.f32.gmra.mrb[0].mxu0 %v515
    %v859 = vpop.f32.mrb[0].mxu0
    %v860 = vadd.f32 %v496, %v859
    %v861 = vpop.f32.mrb[0].mxu0
    %v862 = vadd.f32 %v496, %v861
    %863 = vmatprep.mubr.f32.mxu0 0.0
    %864 = vmatmul.mubr.f32.gmra.mrb[0].mxu0 %v518
    %v865 = vpop.f32.mrb[0].mxu0
    %v866 = vadd.f32 %v501, %v865
    %v867 = vpop.f32.mrb[0].mxu0
    %v868 = vadd.f32 %v501, %v867
    %869 = vmatprep.mubr.f32.mxu0 0.0
    %870 = vmatmul.mubr.f32.gmra.mrb[0].mxu0 %v521
    %v871 = vpop.f32.mrb[0].mxu0
    %v872 = vadd.f32 %v506, %v871
    %v873 = vpop.f32.mrb[0].mxu0
    %v874 = vadd.f32 %v506, %v873
    %875 = vmatprep.mubr.f32.mxu0 0.0
    %876 = vmatmul.mubr.f32.gmra.mrb[0].mxu0 %v524
    %v877 = vpop.f32.mrb[0].mxu0
    %v878 = vadd.f32 %v511, %v877
    %v879 = vpop.f32.mrb[0].mxu0
    %v880 = vadd.f32 %v511, %v879
    %881 = vdwg.mxu0
    %v882 = vtanh.pop %v593
    %v883 = vtanh.pop %v595
    %v884 = vtanh.pop %v682
    %v885 = vtanh.pop %v684
    %v886 = vtanh.pop %v771
    %v887 = vtanh.pop %v773
    %v888 = vtanh.pop %v860
    %v889 = vtanh.pop %v862
    %v890 = vtanh.pop %v599
    %v891 = vtanh.pop %v601
    %v892 = vtanh.pop %v688
    %v893 = vtanh.pop %v690
    %v894 = vtanh.pop %v777
    %v895 = vtanh.pop %v779
    %v896 = vtanh.pop %v866
    %v897 = vtanh.pop %v868
    %v898 = vtanh.pop %v605
    %v899 = vtanh.pop %v607
    %v900 = vtanh.pop %v694
    %v901 = vtanh.pop %v696
    %v902 = vtanh.pop %v783
    %v903 = vtanh.pop %v785
    %v904 = vtanh.pop %v872
    %v905 = vtanh.pop %v874
    %v906 = vtanh.pop %v611
    %v907 = vtanh.pop %v613
    %v908 = vtanh.pop %v700
    %v909 = vtanh.pop %v702
    %v910 = vtanh.pop %v789
    %v911 = vtanh.pop %v791
    %v912 = vtanh.pop %v878
    %v913 = vtanh.pop %v880
    %v914 = vld [vmem:[%s5] sm:$0x7]
    %v915 = vld [vmem:[%s6] sm:$0x7]
    %917 = vset.pattern.permute.xlu0 0
    %918 = vperm.xlu0 %917, %v915
    %v919 = vpop.permute.xlu0 %918
    %v922 = vsel %vm513, %v914, 0
    %924 = vmatprep.subr.mxu0 %v883
    %925 = vmatpush1.msra.mxu0 %v882
    %926 = vmatprep.subr.mxu0 %v891
    %927 = vmatpush1.msra.mxu0 %v890
    %928 = vmatprep.subr.mxu0 %v899
    %929 = vmatpush1.msra.mxu0 %v898
    %930 = vmatprep.subr.mxu0 %v907
    %931 = vmatpush1.msra.mxu0 %v906
    %932 = vmatprep.subr.mxu0 0.0
    %933 = vmatpush1.msra.mxu0 0.0
    %934 = vmatprep.subr.mxu0 0.0
    %935 = vmatpush1.msra.mxu0 0.0
    %936 = vmatprep.subr.mxu0 0.0
    %937 = vmatpush1.msra.mxu0 0.0
    %938 = vmatprep.subr.mxu0 0.0
    %939 = vmatpush1.msra.mxu0 0.0
    %940 = vmatprep.subr.mxu0 0.0
    %941 = vmatpush1.msra.mxu0 0.0
    %942 = vmatprep.subr.mxu0 0.0
    %943 = vmatpush1.msra.mxu0 0.0
    %944 = vmatprep.subr.mxu0 0.0
    %945 = vmatpush1.msra.mxu0 0.0
    %946 = vmatprep.subr.mxu0 0.0
    %947 = vmatpush1.msra.mxu0 0.0
    %948 = vmatprep.subr.mxu0 0.0
    %949 = vmatpush1.msra.mxu0 0.0
    %950 = vmatprep.subr.mxu0 0.0
    %951 = vmatpush1.msra.mxu0 0.0
    %952 = vmatprep.subr.mxu0 0.0
    %953 = vmatpush1.msra.mxu0 0.0
    %954 = vmatprep.subr.mxu0 0.0
    %955 = vmatpush1.msra.mxu0 0.0
    %956 = vmatprep.subr.mxu0 0.0
    %957 = vmatpush1.msra.mxu0 0.0
    %958 = vmatprep.subr.mxu0 0.0
    %959 = vmatpush1.msra.mxu0 0.0
    %960 = vmatprep.subr.mxu0 0.0
    %961 = vmatpush1.msra.mxu0 0.0
    %962 = vmatprep.subr.mxu0 0.0
    %963 = vmatpush1.msra.mxu0 0.0
    %964 = vmatprep.subr.mxu0 0.0
    %965 = vmatpush1.msra.mxu0 0.0
    %966 = vmatprep.subr.mxu0 0.0
    %967 = vmatpush1.msra.mxu0 0.0
    %968 = vmatprep.subr.mxu0 0.0
    %969 = vmatpush1.msra.mxu0 0.0
    %970 = vmatprep.subr.mxu0 0.0
    %971 = vmatpush1.msra.mxu0 0.0
    %972 = vmatprep.subr.mxu0 0.0
    %973 = vmatpush1.msra.mxu0 0.0
    %974 = vmatprep.subr.mxu0 0.0
    %975 = vmatpush1.msra.mxu0 0.0
    %976 = vmatprep.subr.mxu0 0.0
    %977 = vmatpush1.msra.mxu0 0.0
    %978 = vmatprep.subr.mxu0 0.0
    %979 = vmatpush1.msra.mxu0 0.0
    %980 = vmatprep.subr.mxu0 0.0
    %981 = vmatpush1.msra.mxu0 0.0
    %982 = vmatprep.subr.mxu0 0.0
    %983 = vmatpush1.msra.mxu0 0.0
    %984 = vmatprep.subr.mxu0 0.0
    %985 = vmatpush1.msra.mxu0 0.0
    %986 = vmatprep.subr.mxu0 0.0
    %987 = vmatpush1.msra.mxu0 0.0
    %988 = vmatprep.mubr.f32.mxu0 0.0
    %989 = vmatmul.mubr.f32.gmra.mrb[0].mxu0 %v922
    %v990 = vpop.f32.mrb[0].mxu0
    %v991 = vadd.f32 %v919, %v990
    %v992 = vpop.f32.mrb[0].mxu0
    %v993 = vadd.f32 %v919, %v992
    %994 = vdwg.mxu0
    %995 = vmatprep.subr.mxu0 %v885
    %996 = vmatpush1.msra.mxu0 %v884
    %997 = vmatprep.subr.mxu0 %v893
    %998 = vmatpush1.msra.mxu0 %v892
    %999 = vmatprep.subr.mxu0 %v901
    %1000 = vmatpush1.msra.mxu0 %v900
    %1001 = vmatprep.subr.mxu0 %v909
    %1002 = vmatpush1.msra.mxu0 %v908
    %1003 = vmatprep.subr.mxu0 0.0
    %1004 = vmatpush1.msra.mxu0 0.0
    %1005 = vmatprep.subr.mxu0 0.0
    %1006 = vmatpush1.msra.mxu0 0.0
    %1007 = vmatprep.subr.mxu0 0.0
    %1008 = vmatpush1.msra.mxu0 0.0
    %1009 = vmatprep.subr.mxu0 0.0
    %1010 = vmatpush1.msra.mxu0 0.0
    %1011 = vmatprep.subr.mxu0 0.0
    %1012 = vmatpush1.msra.mxu0 0.0
    %1013 = vmatprep.subr.mxu0 0.0
    %1014 = vmatpush1.msra.mxu0 0.0
    %1015 = vmatprep.subr.mxu0 0.0
    %1016 = vmatpush1.msra.mxu0 0.0
    %1017 = vmatprep.subr.mxu0 0.0
    %1018 = vmatpush1.msra.mxu0 0.0
    %1019 = vmatprep.subr.mxu0 0.0
    %1020 = vmatpush1.msra.mxu0 0.0
    %1021 = vmatprep.subr.mxu0 0.0
    %1022 = vmatpush1.msra.mxu0 0.0
    %1023 = vmatprep.subr.mxu0 0.0
    %1024 = vmatpush1.msra.mxu0 0.0
    %1025 = vmatprep.subr.mxu0 0.0
    %1026 = vmatpush1.msra.mxu0 0.0
    %1027 = vmatprep.subr.mxu0 0.0
    %1028 = vmatpush1.msra.mxu0 0.0
    %1029 = vmatprep.subr.mxu0 0.0
    %1030 = vmatpush1.msra.mxu0 0.0
    %1031 = vmatprep.subr.mxu0 0.0
    %1032 = vmatpush1.msra.mxu0 0.0
    %1033 = vmatprep.subr.mxu0 0.0
    %1034 = vmatpush1.msra.mxu0 0.0
    %1035 = vmatprep.subr.mxu0 0.0
    %1036 = vmatpush1.msra.mxu0 0.0
    %1037 = vmatprep.subr.mxu0 0.0
    %1038 = vmatpush1.msra.mxu0 0.0
    %1039 = vmatprep.subr.mxu0 0.0
    %1040 = vmatpush1.msra.mxu0 0.0
    %1041 = vmatprep.subr.mxu0 0.0
    %1042 = vmatpush1.msra.mxu0 0.0
    %1043 = vmatprep.subr.mxu0 0.0
    %1044 = vmatpush1.msra.mxu0 0.0
    %1045 = vmatprep.subr.mxu0 0.0
    %1046 = vmatpush1.msra.mxu0 0.0
    %1047 = vmatprep.subr.mxu0 0.0
    %1048 = vmatpush1.msra.mxu0 0.0
    %1049 = vmatprep.subr.mxu0 0.0
    %1050 = vmatpush1.msra.mxu0 0.0
    %1051 = vmatprep.subr.mxu0 0.0
    %1052 = vmatpush1.msra.mxu0 0.0
    %1053 = vmatprep.subr.mxu0 0.0
    %1054 = vmatpush1.msra.mxu0 0.0
    %1055 = vmatprep.subr.mxu0 0.0
    %1056 = vmatpush1.msra.mxu0 0.0
    %1057 = vmatprep.subr.mxu0 0.0
    %1058 = vmatpush1.msra.mxu0 0.0
    %1059 = vmatprep.mubr.f32.mxu0 0.0
    %1060 = vmatmul.mubr.f32.gmra.mrb[0].mxu0 %v922
    %v1061 = vpop.f32.mrb[0].mxu0
    %v1062 = vadd.f32 %v919, %v1061
    %v1063 = vpop.f32.mrb[0].mxu0
    %v1064 = vadd.f32 %v919, %v1063
    %1065 = vdwg.mxu0
    %1066 = vmatprep.subr.mxu0 %v887
    %1067 = vmatpush1.msra.mxu0 %v886
    %1068 = vmatprep.subr.mxu0 %v895
    %1069 = vmatpush1.msra.mxu0 %v894
    %1070 = vmatprep.subr.mxu0 %v903
    %1071 = vmatpush1.msra.mxu0 %v902
    %1072 = vmatprep.subr.mxu0 %v911
    %1073 = vmatpush1.msra.mxu0 %v910
    %1074 = vmatprep.subr.mxu0 0.0
    %1075 = vmatpush1.msra.mxu0 0.0
    %1076 = vmatprep.subr.mxu0 0.0
    %1077 = vmatpush1.msra.mxu0 0.0
    %1078 = vmatprep.subr.mxu0 0.0
    %1079 = vmatpush1.msra.mxu0 0.0
    %1080 = vmatprep.subr.mxu0 0.0
    %1081 = vmatpush1.msra.mxu0 0.0
    %1082 = vmatprep.subr.mxu0 0.0
    %1083 = vmatpush1.msra.mxu0 0.0
    %1084 = vmatprep.subr.mxu0 0.0
    %1085 = vmatpush1.msra.mxu0 0.0
    %1086 = vmatprep.subr.mxu0 0.0
    %1087 = vmatpush1.msra.mxu0 0.0
    %1088 = vmatprep.subr.mxu0 0.0
    %1089 = vmatpush1.msra.mxu0 0.0
    %1090 = vmatprep.subr.mxu0 0.0
    %1091 = vmatpush1.msra.mxu0 0.0
    %1092 = vmatprep.subr.mxu0 0.0
    %1093 = vmatpush1.msra.mxu0 0.0
    %1094 = vmatprep.subr.mxu0 0.0
    %1095 = vmatpush1.msra.mxu0 0.0
    %1096 = vmatprep.subr.mxu0 0.0
    %1097 = vmatpush1.msra.mxu0 0.0
    %1098 = vmatprep.subr.mxu0 0.0
    %1099 = vmatpush1.msra.mxu0 0.0
    %1100 = vmatprep.subr.mxu0 0.0
    %1101 = vmatpush1.msra.mxu0 0.0
    %1102 = vmatprep.subr.mxu0 0.0
    %1103 = vmatpush1.msra.mxu0 0.0
    %1104 = vmatprep.subr.mxu0 0.0
    %1105 = vmatpush1.msra.mxu0 0.0
    %1106 = vmatprep.subr.mxu0 0.0
    %1107 = vmatpush1.msra.mxu0 0.0
    %1108 = vmatprep.subr.mxu0 0.0
    %1109 = vmatpush1.msra.mxu0 0.0
    %1110 = vmatprep.subr.mxu0 0.0
    %1111 = vmatpush1.msra.mxu0 0.0
    %1112 = vmatprep.subr.mxu0 0.0
    %1113 = vmatpush1.msra.mxu0 0.0
    %1114 = vmatprep.subr.mxu0 0.0
    %1115 = vmatpush1.msra.mxu0 0.0
    %1116 = vmatprep.subr.mxu0 0.0
    %1117 = vmatpush1.msra.mxu0 0.0
    %1118 = vmatprep.subr.mxu0 0.0
    %1119 = vmatpush1.msra.mxu0 0.0
    %1120 = vmatprep.subr.mxu0 0.0
    %1121 = vmatpush1.msra.mxu0 0.0
    %1122 = vmatprep.subr.mxu0 0.0
    %1123 = vmatpush1.msra.mxu0 0.0
    %1124 = vmatprep.subr.mxu0 0.0
    %1125 = vmatpush1.msra.mxu0 0.0
    %1126 = vmatprep.subr.mxu0 0.0
    %1127 = vmatpush1.msra.mxu0 0.0
    %1128 = vmatprep.subr.mxu0 0.0
    %1129 = vmatpush1.msra.mxu0 0.0
    %1130 = vmatprep.mubr.f32.mxu0 0.0
    %1131 = vmatmul.mubr.f32.gmra.mrb[0].mxu0 %v922
    %v1132 = vpop.f32.mrb[0].mxu0
    %v1133 = vadd.f32 %v919, %v1132
    %v1134 = vpop.f32.mrb[0].mxu0
    %v1135 = vadd.f32 %v919, %v1134
    %1136 = vdwg.mxu0
    %1137 = vmatprep.subr.mxu0 %v889
    %1138 = vmatpush1.msra.mxu0 %v888
    %1139 = vmatprep.subr.mxu0 %v897
    %1140 = vmatpush1.msra.mxu0 %v896
    %1141 = vmatprep.subr.mxu0 %v905
    %1142 = vmatpush1.msra.mxu0 %v904
    %1143 = vmatprep.subr.mxu0 %v913
    %1144 = vmatpush1.msra.mxu0 %v912
    %1145 = vmatprep.subr.mxu0 0.0
    %1146 = vmatpush1.msra.mxu0 0.0
    %1147 = vmatprep.subr.mxu0 0.0
    %1148 = vmatpush1.msra.mxu0 0.0
    %1149 = vmatprep.subr.mxu0 0.0
    %1150 = vmatpush1.msra.mxu0 0.0
    %1151 = vmatprep.subr.mxu0 0.0
    %1152 = vmatpush1.msra.mxu0 0.0
    %1153 = vmatprep.subr.mxu0 0.0
    %1154 = vmatpush1.msra.mxu0 0.0
    %1155 = vmatprep.subr.mxu0 0.0
    %1156 = vmatpush1.msra.mxu0 0.0
    %1157 = vmatprep.subr.mxu0 0.0
    %1158 = vmatpush1.msra.mxu0 0.0
    %1159 = vmatprep.subr.mxu0 0.0
    %1160 = vmatpush1.msra.mxu0 0.0
    %1161 = vmatprep.subr.mxu0 0.0
    %1162 = vmatpush1.msra.mxu0 0.0
    %1163 = vmatprep.subr.mxu0 0.0
    %1164 = vmatpush1.msra.mxu0 0.0
    %1165 = vmatprep.subr.mxu0 0.0
    %1166 = vmatpush1.msra.mxu0 0.0
    %1167 = vmatprep.subr.mxu0 0.0
    %1168 = vmatpush1.msra.mxu0 0.0
    %1169 = vmatprep.subr.mxu0 0.0
    %1170 = vmatpush1.msra.mxu0 0.0
    %1171 = vmatprep.subr.mxu0 0.0
    %1172 = vmatpush1.msra.mxu0 0.0
    %1173 = vmatprep.subr.mxu0 0.0
    %1174 = vmatpush1.msra.mxu0 0.0
    %1175 = vmatprep.subr.mxu0 0.0
    %1176 = vmatpush1.msra.mxu0 0.0
    %1177 = vmatprep.subr.mxu0 0.0
    %1178 = vmatpush1.msra.mxu0 0.0
    %1179 = vmatprep.subr.mxu0 0.0
    %1180 = vmatpush1.msra.mxu0 0.0
    %1181 = vmatprep.subr.mxu0 0.0
    %1182 = vmatpush1.msra.mxu0 0.0
    %1183 = vmatprep.subr.mxu0 0.0
    %1184 = vmatpush1.msra.mxu0 0.0
    %1185 = vmatprep.subr.mxu0 0.0
    %1186 = vmatpush1.msra.mxu0 0.0
    %1187 = vmatprep.subr.mxu0 0.0
    %1188 = vmatpush1.msra.mxu0 0.0
    %1189 = vmatprep.subr.mxu0 0.0
    %1190 = vmatpush1.msra.mxu0 0.0
    %1191 = vmatprep.subr.mxu0 0.0
    %1192 = vmatpush1.msra.mxu0 0.0
    %1193 = vmatprep.subr.mxu0 0.0
    %1194 = vmatpush1.msra.mxu0 0.0
    %1195 = vmatprep.subr.mxu0 0.0
    %1196 = vmatpush1.msra.mxu0 0.0
    %1197 = vmatprep.subr.mxu0 0.0
    %1198 = vmatpush1.msra.mxu0 0.0
    %1199 = vmatprep.subr.mxu0 0.0
    %1200 = vmatpush1.msra.mxu0 0.0
    %1201 = vmatprep.mubr.f32.mxu0 0.0
    %1202 = vmatmul.mubr.f32.gmra.mrb[0].mxu0 %v922
    %v1203 = vpop.f32.mrb[0].mxu0
    %v1204 = vadd.f32 %v919, %v1203
    %v1205 = vpop.f32.mrb[0].mxu0
    %v1206 = vadd.f32 %v919, %v1205
    %1207 = vdwg.mxu0
    %v1216 = vcombine.low %v991, %v993
    %v1217 = vcombine.low %v1062, %v1064
    %v1218 = vcombine.low %v1133, %v1135
    %v1219 = vcombine.low %v1204, %v1206
    %1224 = vst [vmem:[#allocation2] sm:$0x77] %v1216
    %1225 = vst [vmem:[#allocation2 + $0x8] sm:$0x77] %v1217
    %1226 = vst [vmem:[#allocation2 + $0x10] sm:$0x77] %v1218
    %1227 = vst [vmem:[#allocation2 + $0x18] sm:$0x77] %v1219
    // Predicated region
    $region30: #{tpu_custom_call.1} parent=1 // pred_check
      _
    $region31: #{tpu_custom_call.1} parent=1 // pred_check_branch
      %1229 = sbr.rel (0) target = $region33
    $region32: #{tpu_custom_call.1} parent=1 // pred_region
      %s1231 = ssub.s32 512, 512
      %1232 = vsyncadd [#allocation3], %s1231
      %s1234 = sshll.u32 [#allocation2], 4
      %s1235 = int_to_ptr.vmem [resolvable:$true] %s1234
      %1237 = dma.vmem_to_hbm [thread:$0]  %s1235, 512, %s7, [#allocation3]
    $region33: #{tpu_custom_call.1} parent=1 // pred_fallthru
      _
    // Predicated region
    $region34: #{tpu_custom_call.1} parent=1 // pred_check
      _
    $region35: #{tpu_custom_call.1} parent=1 // pred_check_branch
      %1239 = sbr.rel (0) target = $region37
    $region36: #{tpu_custom_call.1} parent=1 // pred_region
      %1240 = dma.done [#allocation3], 512
    $region37: #{tpu_custom_call.1} parent=1 // pred_fallthru
      _
    %1241 = vsyncpa [#allocation3], 1

</llo_original>
